<compile_context>
chip_gen: v7x
topology: tpu7x:2x2x1
jax: 0.10.0
libtpu: 0.0.40
codegen_flags: <defaults>
</compile_context>

<pallas_src>
import jax
import jax.numpy as jnp
import numpy as np
from jax import lax
from jax.experimental import pallas as pl
from jax.experimental.pallas import tpu as pltpu

IN_FEATURES = 128   # ParamActor hard-codes nn.Linear(128, action_parameter_size)
LANE = 128
SUBLANE = 8


def param_actor_kernel(x_ref, w_ref, b_ref, o_ref):
    """One batch tile of the o1_scorer Linear: o = x @ W^T + b (lane-dense)."""
    o_ref[...] = (
        jnp.dot(x_ref[...], w_ref[...], preferred_element_type=jnp.float32)
        + b_ref[...]
    )
    # NOTE: on v5e, casting x/w to bf16 here (keeping f32 accumulation via
    # preferred_element_type) would hit native MXU rate; kept f32 for exactness
    # at these tiny shapes.


def _round_up(n, m):
    return ((n + m - 1) // m) * m


def param_actor_forward(state, weight, bias, *, tb=None):
    """state: [B, 128] f32; weight: [aps, 128] (PyTorch layout); bias: [aps].

    Returns [B, aps] f32, matching nn.Linear(128, aps)(state).
    """
    B, K = state.shape
    assert K == IN_FEATURES
    aps = weight.shape[0]

    # ---- wrapper-side layout plumbing (no compute hoisting) ----------------
    aps_p = _round_up(aps, LANE)                      # lane-dense output slab
    if tb is None:
        tb = min(_round_up(B, SUBLANE), 128)          # batch tile, sublane aligned
    tb = _round_up(tb, SUBLANE)
    B_p = _round_up(B, tb)

    x_p = jnp.zeros((B_p, IN_FEATURES), jnp.float32).at[:B, :].set(state)
    w_p = jnp.zeros((IN_FEATURES, aps_p), jnp.float32).at[:, :aps].set(weight.T)
    b_p = jnp.zeros((1, aps_p), jnp.float32).at[:, :aps].set(bias[None, :])

    grid = (B_p // tb,)

    out_p = pl.pallas_call(
        param_actor_kernel,
        out_shape=jax.ShapeDtypeStruct((B_p, aps_p), jnp.float32),
        grid_spec=pltpu.PrefetchScalarGridSpec(
            num_scalar_prefetch=0,
            grid=grid,
            in_specs=[
                pl.BlockSpec((tb, IN_FEATURES), lambda i: (i, 0)),    # x: tiled on B
                pl.BlockSpec((IN_FEATURES, aps_p), lambda i: (0, 0)),  # W^T: resident
                pl.BlockSpec((1, aps_p), lambda i: (0, 0)),            # bias: resident
            ],
            out_specs=pl.BlockSpec((tb, aps_p), lambda i: (i, 0)),
        ),
        compiler_params=pltpu.CompilerParams(
            dimension_semantics=("parallel",),   # batch axis: megacore-shardable
            vmem_limit_bytes=64 << 20,
        ),
    )(x_p, w_p, b_p)

    return out_p[:B, :aps]


def ref_forward(state, weight, bias):
    """Pure-JAX reference mirroring PyTorch's nn.Linear forward."""
    return (
        jnp.dot(state, weight.T, precision=lax.Precision.HIGHEST) + bias[None, :]
    )


if __name__ == "__main__":
    B = 2
    action_parameter_size = 8   # small demo aps

    key = jax.random.PRNGKey(0)
    kx, kw, kb = jax.random.split(key, 3)
    bound = 1.0 / np.sqrt(IN_FEATURES)        # nn.Linear default init range
    weight = jax.random.uniform(
        kw, (action_parameter_size, IN_FEATURES), jnp.float32, -bound, bound)
    bias = jax.random.uniform(
        kb, (action_parameter_size,), jnp.float32, -bound, bound)
    state = jax.random.normal(kx, (B, IN_FEATURES), jnp.float32)

    out = param_actor_forward(state, weight, bias)
    jax.block_until_ready(out)

    ref = ref_forward(state, weight, bias)
    assert out.shape == (B, action_parameter_size)
    np.testing.assert_allclose(np.asarray(out), np.asarray(ref),
                               rtol=1e-2, atol=1e-2)

    print("KERNEL_OK")
</pallas_src>

<mosaic_0001>
module attributes {stable_mosaic.version = 11 : i64} {
  func.func @param_actor_kernel(%arg0: i32, %arg1: memref<8x128xf32, #tpu.memory_space<vmem>>, %arg2: memref<128x128xf32, #tpu.memory_space<vmem>>, %arg3: memref<1x128xf32, #tpu.memory_space<vmem>>, %arg4: memref<8x128xf32, #tpu.memory_space<vmem>>) attributes {dimension_semantics = [#tpu.dimension_semantics<parallel>], iteration_bounds = array<i64: 1>, scalar_prefetch = 0 : i64, scratch_operands = 0 : i64, tpu.core_type = #tpu.core_type<tc>, window_params = [{transform_indices = @transform_0, window_bounds = array<i64: 8, 128>}, {pipeline_mode = #tpu.pipeline_mode<synchronous>, transform_indices = @transform_1, window_bounds = array<i64: 128, 128>}, {pipeline_mode = #tpu.pipeline_mode<synchronous>, transform_indices = @transform_2, window_bounds = array<i64: 1, 128>}, {transform_indices = @transform_3, window_bounds = array<i64: 8, 128>}]} {
    %c0 = arith.constant 0 : index
    %c0_0 = arith.constant 0 : index
    %0 = vector.load %arg1[%c0, %c0_0] : memref<8x128xf32, #tpu.memory_space<vmem>>, vector<8x128xf32>
    %c0_1 = arith.constant 0 : index
    %c0_2 = arith.constant 0 : index
    %1 = vector.load %arg2[%c0_1, %c0_2] : memref<128x128xf32, #tpu.memory_space<vmem>>, vector<128x128xf32>
    %cst = arith.constant dense<0.000000e+00> : vector<8x128xf32>
    %2 = tpu.matmul %0, %1, %cst {dimension_numbers = #tpu.dot_dimension_numbers<[1], [0], [0], [1], [0, 0, 1, 1], [], []>} : vector<8x128xf32>, vector<128x128xf32>, vector<8x128xf32> -> vector<8x128xf32>
    %c0_3 = arith.constant 0 : index
    %c0_4 = arith.constant 0 : index
    %3 = vector.load %arg3[%c0_3, %c0_4] : memref<1x128xf32, #tpu.memory_space<vmem>>, vector<1x128xf32>
    %4 = vector.broadcast %3 : vector<1x128xf32> to vector<8x128xf32>
    %5 = arith.addf %2, %4 : vector<8x128xf32>
    %c0_5 = arith.constant 0 : index
    %c0_6 = arith.constant 0 : index
    %6 = vector.load %arg4[%c0_5, %c0_6] : memref<8x128xf32, #tpu.memory_space<vmem>>, vector<8x128xf32>
    tpu.vector_store %arg4[%c0_5, %c0_6], %5 {strides = array<i32>} : memref<8x128xf32, #tpu.memory_space<vmem>>, vector<8x128xf32>,
    return
  }
  func.func @transform_0(%arg0: i32) -> (i32, i32) {
    %c0_i32 = arith.constant 0 : i32
    %c0_i32_0 = arith.constant 0 : i32
    return %arg0, %c0_i32 : i32, i32
  }
  func.func @transform_1(%arg0: i32) -> (i32, i32) {
    %c0_i32 = arith.constant 0 : i32
    %c0_i32_0 = arith.constant 0 : i32
    %c0_i32_1 = arith.constant 0 : i32
    return %c0_i32, %c0_i32_0 : i32, i32
  }
  func.func @transform_2(%arg0: i32) -> (i32, i32) {
    %c0_i32 = arith.constant 0 : i32
    %c0_i32_0 = arith.constant 0 : i32
    %c0_i32_1 = arith.constant 0 : i32
    return %c0_i32, %c0_i32_0 : i32, i32
  }
  func.func @transform_3(%arg0: i32) -> (i32, i32) {
    %c0_i32 = arith.constant 0 : i32
    %c0_i32_0 = arith.constant 0 : i32
    return %arg0, %c0_i32 : i32, i32
  }
}

</mosaic_0001>

<llo_original>
// kernel: tpu_custom_call.1
$region0: #{tpu_custom_call.1}
  #allocation0 [shape = 'u32[]', space=smem, size = 0x4, offset = 0x4, fixed_abs, tag = 'smem constant byte address 0x4 - core index']
  #allocation1 [shape = 'u32[144,128]{1,0:T(1,128)}', space=vmem, size = 0x12000, scoped, tag = 'internal scratch']
  %s0 = inlined_call_operand.hbm [shape: f32[8,128], index: 0, kind: input, shape index: {}]
  %s1 = inlined_call_operand.hbm [shape: f32[128,128], index: 1, kind: input, shape index: {}]
  %s2 = inlined_call_operand.hbm [shape: f32[1,128], index: 2, kind: input, shape index: {}]
  %s3 = inlined_call_operand.hbm [shape: f32[8,128], index: 3, kind: output, shape index: {}]
  %s4 = sld [smem:[#allocation0]]
  $region34: #{tpu_custom_call.1} parent=0
    _
  %s6 = ssub.s32 1, %s4
  %s7 = scalar_select 0, %s6, %s4
  $region1: #{tpu_custom_call.1} parent=0
    #allocation2 [shape = 'u8[4096]{0}', space=vmem, size = 0x1000, scoped, tag = 'input window, operand 0, single buffered']
    #allocation3 [shape = 's32[1]{0}', space=sflag, size = 0x4, scoped, tag = 'scoped memory for tpu_custom_call.1']
    #allocation4 [shape = 's32[1]{0}', space=sflag, size = 0x4, scoped, tag = 'scoped memory for tpu_custom_call.1']
    #allocation5 [shape = 'u8[65536]{0}', space=vmem, size = 0x10000, scoped, tag = 'input window, operand 1, single buffered']
    #allocation6 [shape = 's32[1]{0}', space=sflag, size = 0x4, scoped, tag = 'scoped memory for tpu_custom_call.1']
    #allocation7 [shape = 'u8[512]{0}', space=vmem, size = 0x400, scoped, tag = 'input window, operand 2, single buffered']
    #allocation8 [shape = 'u8[4096]{0}', space=vmem, size = 0x1000, scoped, tag = 'output window, operand 0, single buffered']
    %8 = vsyncpa [#allocation3], 0
    %9 = vsyncpa [#allocation6], 0
    %10 = vsyncpa [#allocation4], 0
    // Predicated region
    $region2: #{tpu_custom_call.1} parent=1 // pred_check
      _
    $region3: #{tpu_custom_call.1} parent=1 // pred_check_branch
      %12 = sbr.rel (0) target = $region5
    $region4: #{tpu_custom_call.1} parent=1 // pred_region
      %s14 = ssub.s32 128, 128
      %15 = vsyncadd [#allocation3], %s14
      %s17 = sshll.u32 [#allocation2], 4
      %s18 = int_to_ptr.vmem [resolvable:$true] %s17
      %20 = dma.hbm_to_vmem [thread:$0]  %s0, 128, %s18, [#allocation3]
    $region5: #{tpu_custom_call.1} parent=1 // pred_fallthru
      _
    // Predicated region
    $region6: #{tpu_custom_call.1} parent=1 // pred_check
      _
    $region7: #{tpu_custom_call.1} parent=1 // pred_check_branch
      %22 = sbr.rel (0) target = $region9
    $region8: #{tpu_custom_call.1} parent=1 // pred_region
      %s24 = ssub.s32 2048, 2048
      %25 = vsyncadd [#allocation6], %s24
      %s26 = sshll.u32 [#allocation5], 4
      %s27 = int_to_ptr.vmem [resolvable:$true] %s26
      %32 = dma.hbm_to_vmem [thread:$0]  %s1, 2048, %s27, [#allocation6], 128, 128, 8
    $region9: #{tpu_custom_call.1} parent=1 // pred_fallthru
      _
    // Predicated region
    $region10: #{tpu_custom_call.1} parent=1 // pred_check
      _
    $region11: #{tpu_custom_call.1} parent=1 // pred_check_branch
      %34 = sbr.rel (0) target = $region13
    $region12: #{tpu_custom_call.1} parent=1 // pred_region
      %s36 = ssub.s32 16, 16
      %37 = vsyncadd [#allocation6], %s36
      %s39 = sshll.u32 [#allocation7], 4
      %s40 = int_to_ptr.vmem [resolvable:$true] %s39
      %42 = dma.hbm_to_vmem [thread:$0]  %s2, 16, %s40, [#allocation6]
    $region13: #{tpu_custom_call.1} parent=1 // pred_fallthru
      _
    // Predicated region
    $region14: #{tpu_custom_call.1} parent=1 // pred_check
      _
    $region15: #{tpu_custom_call.1} parent=1 // pred_check_branch
      %44 = sbr.rel (0) target = $region17
    $region16: #{tpu_custom_call.1} parent=1 // pred_region
      %45 = dma.done [#allocation3], 128
    $region17: #{tpu_custom_call.1} parent=1 // pred_fallthru
      _
    // Predicated region
    $region18: #{tpu_custom_call.1} parent=1 // pred_check
      _
    $region19: #{tpu_custom_call.1} parent=1 // pred_check_branch
      %47 = sbr.rel (0) target = $region21
    $region20: #{tpu_custom_call.1} parent=1 // pred_region
      %48 = dma.done [#allocation6], 2048
    $region21: #{tpu_custom_call.1} parent=1 // pred_fallthru
      _
    // Predicated region
    $region22: #{tpu_custom_call.1} parent=1 // pred_check
      _
    $region23: #{tpu_custom_call.1} parent=1 // pred_check_branch
      %50 = sbr.rel (0) target = $region25
    $region24: #{tpu_custom_call.1} parent=1 // pred_region
      %51 = dma.done [#allocation6], 16
    $region25: #{tpu_custom_call.1} parent=1 // pred_fallthru
      _
    %v52 = vld [vmem:[#allocation2] sm:$0xff]
    %v53 = vld [vmem:[#allocation5] sm:$0xff]
    %v54 = vld [vmem:[#allocation5 + $0x8] sm:$0xff]
    %v55 = vld [vmem:[#allocation5 + $0x10] sm:$0xff]
    %v56 = vld [vmem:[#allocation5 + $0x18] sm:$0xff]
    %v57 = vld [vmem:[#allocation5 + $0x20] sm:$0xff]
    %v58 = vld [vmem:[#allocation5 + $0x28] sm:$0xff]
    %v59 = vld [vmem:[#allocation5 + $0x30] sm:$0xff]
    %v60 = vld [vmem:[#allocation5 + $0x38] sm:$0xff]
    %v61 = vld [vmem:[#allocation5 + $0x40] sm:$0xff]
    %v62 = vld [vmem:[#allocation5 + $0x48] sm:$0xff]
    %v63 = vld [vmem:[#allocation5 + $0x50] sm:$0xff]
    %v64 = vld [vmem:[#allocation5 + $0x58] sm:$0xff]
    %v65 = vld [vmem:[#allocation5 + $0x60] sm:$0xff]
    %v66 = vld [vmem:[#allocation5 + $0x68] sm:$0xff]
    %v67 = vld [vmem:[#allocation5 + $0x70] sm:$0xff]
    %v68 = vld [vmem:[#allocation5 + $0x78] sm:$0xff]
    %v69 = vld [vmem:[#allocation7] sm:$0x1]
    %v71 = vlaneseq
    %v72 = vshrl.u32 %v71, 7
    %v73 = vsub.s32 0, %v72
    %v74 = vrot.slane %v69, %v73
    %76 = vmatprep.subr.mxu0 0.0
    %77 = vmatpush1.msra.mxu0 %v53
    %78 = vmatprep.subr.mxu0 0.0
    %79 = vmatpush1.msra.mxu0 %v54
    %80 = vmatprep.subr.mxu0 0.0
    %81 = vmatpush1.msra.mxu0 %v55
    %82 = vmatprep.subr.mxu0 0.0
    %83 = vmatpush1.msra.mxu0 %v56
    %84 = vmatprep.subr.mxu0 0.0
    %85 = vmatpush1.msra.mxu0 %v57
    %86 = vmatprep.subr.mxu0 0.0
    %87 = vmatpush1.msra.mxu0 %v58
    %88 = vmatprep.subr.mxu0 0.0
    %89 = vmatpush1.msra.mxu0 %v59
    %90 = vmatprep.subr.mxu0 0.0
    %91 = vmatpush1.msra.mxu0 %v60
    %92 = vmatprep.subr.mxu0 0.0
    %93 = vmatpush1.msra.mxu0 %v61
    %94 = vmatprep.subr.mxu0 0.0
    %95 = vmatpush1.msra.mxu0 %v62
    %96 = vmatprep.subr.mxu0 0.0
    %97 = vmatpush1.msra.mxu0 %v63
    %98 = vmatprep.subr.mxu0 0.0
    %99 = vmatpush1.msra.mxu0 %v64
    %100 = vmatprep.subr.mxu0 0.0
    %101 = vmatpush1.msra.mxu0 %v65
    %102 = vmatprep.subr.mxu0 0.0
    %103 = vmatpush1.msra.mxu0 %v66
    %104 = vmatprep.subr.mxu0 0.0
    %105 = vmatpush1.msra.mxu0 %v67
    %106 = vmatprep.subr.mxu0 0.0
    %107 = vmatpush1.msra.mxu0 %v68
    %108 = vmatprep.subr.mxu0 0.0
    %109 = vmatpush1.msra.mxu0 0.0
    %110 = vmatprep.subr.mxu0 0.0
    %111 = vmatpush1.msra.mxu0 0.0
    %112 = vmatprep.subr.mxu0 0.0
    %113 = vmatpush1.msra.mxu0 0.0
    %114 = vmatprep.subr.mxu0 0.0
    %115 = vmatpush1.msra.mxu0 0.0
    %116 = vmatprep.subr.mxu0 0.0
    %117 = vmatpush1.msra.mxu0 0.0
    %118 = vmatprep.subr.mxu0 0.0
    %119 = vmatpush1.msra.mxu0 0.0
    %120 = vmatprep.subr.mxu0 0.0
    %121 = vmatpush1.msra.mxu0 0.0
    %122 = vmatprep.subr.mxu0 0.0
    %123 = vmatpush1.msra.mxu0 0.0
    %124 = vmatprep.subr.mxu0 0.0
    %125 = vmatpush1.msra.mxu0 0.0
    %126 = vmatprep.subr.mxu0 0.0
    %127 = vmatpush1.msra.mxu0 0.0
    %128 = vmatprep.subr.mxu0 0.0
    %129 = vmatpush1.msra.mxu0 0.0
    %130 = vmatprep.subr.mxu0 0.0
    %131 = vmatpush1.msra.mxu0 0.0
    %132 = vmatprep.subr.mxu0 0.0
    %133 = vmatpush1.msra.mxu0 0.0
    %134 = vmatprep.subr.mxu0 0.0
    %135 = vmatpush1.msra.mxu0 0.0
    %136 = vmatprep.subr.mxu0 0.0
    %137 = vmatpush1.msra.mxu0 0.0
    %138 = vmatprep.subr.mxu0 0.0
    %139 = vmatpush1.msra.mxu0 0.0
    %140 = vmatprep.mubr.f32.mxu0 0.0
    %141 = vmatmul.mubr.f32.gmra.mrb[0].mxu0 %v52
    %v142 = vpop.f32.mrb[0].mxu0
    %v143 = vadd.f32 %v74, %v142
    %v144 = vpop.f32.mrb[0].mxu0
    %145 = vdwg.mxu0
    %146 = vst [vmem:[#allocation8] sm:$0xff] %v143
    // Predicated region
    $region26: #{tpu_custom_call.1} parent=1 // pred_check
      _
    $region27: #{tpu_custom_call.1} parent=1 // pred_check_branch
      %148 = sbr.rel (0) target = $region29
    $region28: #{tpu_custom_call.1} parent=1 // pred_region
      %s150 = ssub.s32 128, 128
      %151 = vsyncadd [#allocation4], %s150
      %s153 = sshll.u32 [#allocation8], 4
      %s154 = int_to_ptr.vmem [resolvable:$true] %s153
      %156 = dma.vmem_to_hbm [thread:$0]  %s154, 128, %s3, [#allocation4]
    $region29: #{tpu_custom_call.1} parent=1 // pred_fallthru
      _
    // Predicated region
    $region30: #{tpu_custom_call.1} parent=1 // pred_check
      _
    $region31: #{tpu_custom_call.1} parent=1 // pred_check_branch
      %158 = sbr.rel (0) target = $region33
    $region32: #{tpu_custom_call.1} parent=1 // pred_region
      %159 = dma.done [#allocation4], 128
    $region33: #{tpu_custom_call.1} parent=1 // pred_fallthru
      _
    %160 = vsyncpa [#allocation3], 1
    %161 = vsyncpa [#allocation6], 1
    %162 = vsyncpa [#allocation4], 1

</llo_original>
